<compile_context>
chip_gen: v7x
topology: tpu7x:2x2x1
jax: 0.10.0
libtpu: 0.0.40
codegen_flags: <defaults>
</compile_context>

<pallas_src>
import functools

import jax
import jax.numpy as jnp
from jax.experimental import pallas as pl
from jax.experimental.pallas import tpu as pltpu

LANE = 128  # minor (lane) tile


def _round_up(n, m):
    return (n + m - 1) // m * m


def _resmlp_kernel(n_hidden, *refs):
    """refs = x, w0, [wh], wl, bh, bl, o.

    x  : [tb, d_in]           f32   unpadded input tile (cast to bf16 here)
    w0 : [d_in, Hp]           bf16  first Linear (output dim zero-padded)
    wh : [n_hidden, Hp, Hp]   bf16  stacked hidden Linears (absent if n_hidden==0)
    wl : [Hp, d_out]          bf16  last Linear (K zero-padded, output unpadded)
    bh : [n_hidden+1, Hp]     f32   biases of layer0 + hidden layers (zero-padded)
    bl : [1, d_out]           f32   last bias
    o  : [tb, d_out]          f32   output tile (true width, masked narrow store)
    """
    if n_hidden > 0:
        x_ref, w0_ref, wh_ref, wl_ref, bh_ref, bl_ref, o_ref = refs
    else:
        x_ref, w0_ref, wl_ref, bh_ref, bl_ref, o_ref = refs
        wh_ref = None

    cdt = w0_ref.dtype  # bf16 (MXU-native); accumulation stays f32 throughout.

    # Layer 0: Linear(input_dim, hidden_dim) — no residual around it.
    h = (jnp.dot(x_ref[...].astype(cdt), w0_ref[...],
                 preferred_element_type=jnp.float32)
         + bh_ref[0:1, :])

    # Residual ReLU:  h = relu(h) + h
    # NOTE: the PyTorch module uses nn.ReLU(inplace=True) inside
    # "x = layer(x) + x"; we implement the intended residual relu(x) + x,
    # matching the previously accepted reference semantics.
    h = h + jnp.maximum(h, 0.0)

    # Residual hidden blocks:  h = Linear_i(h) + h ; h = relu(h) + h
    for i in range(n_hidden):
        y = (jnp.dot(h.astype(cdt), wh_ref[i],
                     preferred_element_type=jnp.float32)
             + bh_ref[i + 1:i + 2, :])
        h = h + y
        h = h + jnp.maximum(h, 0.0)

    # Final projection (no residual, no ReLU), written at true output width.
    out = (jnp.dot(h.astype(cdt), wl_ref[...],
                   preferred_element_type=jnp.float32)
           + bl_ref[...])
    o_ref[...] = out.astype(o_ref.dtype)


def resmlp_forward(x, weights, biases, *, batch_tile=512,
                   compute_dtype=jnp.bfloat16):
    """Fused ResMLP forward.

    Args:
      x:       [B, D_in] float32.
      weights: list of [D_in_i, D_out_i] float32 (x @ W layout).
      biases:  list of [1, D_out_i] float32.
      batch_tile: max rows per grid step.
      compute_dtype: matmul input dtype (bf16 is MXU-native on v5e/v6e/v7x).
    Returns:
      [B, D_out_last] float32.
    """
    n_layers = len(weights)
    assert n_layers >= 2, "need at least Linear0 and the output Linear"
    n_hidden = n_layers - 2
    B, d_in = x.shape
    hidden = weights[0].shape[1]
    d_out = weights[-1].shape[1]
    for w in weights[1:-1]:
        assert w.shape == (hidden, hidden)
    assert weights[-1].shape[0] == hidden

    hp = _round_up(hidden, LANE)

    # ---- weights/biases: zero-pad only the hidden dims to 128 lanes ---------
    # (exact: padded W rows/cols and bias lanes are 0, so padded activation
    # lanes stay 0 through every residual Linear/ReLU).
    w0 = jnp.pad(weights[0], ((0, 0), (0, hp - hidden))).astype(compute_dtype)
    wl = jnp.pad(weights[-1], ((0, hp - hidden), (0, 0))).astype(compute_dtype)
    if n_hidden > 0:
        wh = jnp.stack([jnp.pad(w, ((0, hp - hidden), (0, hp - hidden)))
                        for w in weights[1:-1]]).astype(compute_dtype)
    bh = jnp.stack([jnp.pad(b.reshape(-1), (0, hp - hidden))
                    for b in biases[:-1]]).astype(jnp.float32)    # [n_hidden+1, hp]
    bl = biases[-1].reshape(1, -1).astype(jnp.float32)            # [1, d_out]

    # ---- batch tiling: 16-row granule (bf16 packing), >= 2 grid steps so the
    # "parallel" grid axis can shard across v7x's two TensorCores -------------
    row_granule = max(8, 32 // jnp.dtype(compute_dtype).itemsize)
    b_ceil = _round_up(B, row_granule)
    tb = max(row_granule,
             min(_round_up(batch_tile, row_granule),
                 _round_up(pl.cdiv(b_ceil, 2), row_granule)))
    b_pad = _round_up(B, tb)
    grid = (b_pad // tb,)

    # Only the batch edge is padded (f32, no lane amplification); the common
    # divisible case takes the no-copy path.
    x_in = x if b_pad == B else jnp.pad(x, ((0, b_pad - B), (0, 0)))

    # ---- VMEM budget (per-generation ceiling with headroom) -----------------
    def nbytes(a):
        return int(a.size) * a.dtype.itemsize

    weight_ops = [w0, wl] + ([wh] if n_hidden > 0 else [])
    bias_ops = [bh, bl]
    # Constant-index blocks are fetched once (index unchanged across steps),
    # but budget their double-buffer allocation anyway.
    resident = 2 * sum(nbytes(a) for a in weight_ops + bias_ops)
    io = 2 * tb * d_in * 4 + 2 * tb * d_out * 4      # double-buffered x / out tiles
    act = 4 * tb * hp * 4                            # live f32 h + bf16 casts (slack)
    vmem_est = resident + io + act + (2 << 20)

    try:
        vmem_cap = pltpu.get_tpu_info().vmem_capacity_bytes
    except Exception:
        vmem_cap = 64 << 20                          # assume smallest (v7x per-TC) VMEM
    # ~56 MiB ceiling on v7x (64 MiB/TC), ~112 MiB on v5e/v6e (128 MiB).
    vmem_ceiling = min(vmem_cap - (8 << 20), vmem_cap * 7 // 8)
    vmem_limit = int(min(vmem_ceiling, max(vmem_est, 16 << 20)))
    # TODO(synk): if vmem_est ever exceeds vmem_ceiling (very deep/wide ResMLP),
    # keep the fusion and stream the stacked hidden weights layer-by-layer via
    # memory_space=pl.ANY + pltpu.emit_pipeline instead of splitting into
    # per-layer pallas_calls (which would round-trip activations through HBM).

    flops = 2 * b_pad * (d_in * hp + n_hidden * hp * hp + hp * d_out)
    bytes_accessed = (b_pad * d_in * 4
                      + sum(nbytes(a) for a in weight_ops + bias_ops)
                      + b_pad * d_out * 4)
    cost = pl.CostEstimate(flops=flops, transcendentals=0,
                           bytes_accessed=bytes_accessed)

    # ---- specs ---------------------------------------------------------------
    in_specs = [pl.BlockSpec((tb, d_in), lambda i: (i, 0)),   # x: batch-tiled, lanes unpadded
                pl.BlockSpec(w0.shape, lambda i: (0, 0))]
    args = [x_in, w0]
    if n_hidden > 0:
        in_specs.append(pl.BlockSpec(wh.shape, lambda i: (0, 0, 0)))
        args.append(wh)
    in_specs += [pl.BlockSpec(wl.shape, lambda i: (0, 0)),
                 pl.BlockSpec(bh.shape, lambda i: (0, 0)),
                 pl.BlockSpec(bl.shape, lambda i: (0, 0))]
    args += [wl, bh, bl]

    out = pl.pallas_call(
        functools.partial(_resmlp_kernel, n_hidden),
        out_shape=jax.ShapeDtypeStruct((b_pad, d_out), jnp.float32),
        grid_spec=pltpu.PrefetchScalarGridSpec(
            num_scalar_prefetch=0,
            grid=grid,
            in_specs=in_specs,
            out_specs=pl.BlockSpec((tb, d_out), lambda i: (i, 0)),
        ),
        compiler_params=pltpu.CompilerParams(
            dimension_semantics=("parallel",),
            vmem_limit_bytes=vmem_limit,
        ),
        cost_estimate=cost,
    )(*args)

    return out if b_pad == B else out[:B]


def init_resmlp_params(key, input_dim, output_dim, hidden_dim=64, n_hidden=1):
    """PyTorch nn.Linear-style init; weights stored transposed as [d_in, d_out]."""
    dims = [input_dim] + [hidden_dim] * (n_hidden + 1) + [output_dim]
    weights, biases = [], []
    for li in range(len(dims) - 1):
        d_in, d_out = dims[li], dims[li + 1]
        key, wk, bk = jax.random.split(key, 3)
        bound = 1.0 / jnp.sqrt(d_in)
        weights.append(jax.random.uniform(wk, (d_in, d_out), jnp.float32,
                                          minval=-bound, maxval=bound))
        biases.append(jax.random.uniform(bk, (1, d_out), jnp.float32,
                                         minval=-bound, maxval=bound))
    return weights, biases


def resmlp_reference(x, weights, biases, compute_dtype=jnp.bfloat16):
    """Pure-JAX ResMLP with the same bf16-input / f32-accumulate numerics."""
    def linear(a, w, b):
        return (jnp.dot(a.astype(compute_dtype), w.astype(compute_dtype),
                        preferred_element_type=jnp.float32)
                + b.reshape(1, -1))

    h = linear(x, weights[0], biases[0])
    h = h + jnp.maximum(h, 0.0)                      # residual ReLU
    for i in range(1, len(weights) - 1):
        h = h + linear(h, weights[i], biases[i])     # residual Linear
        h = h + jnp.maximum(h, 0.0)                  # residual ReLU
    return linear(h, weights[-1], biases[-1])


if __name__ == "__main__":
    key = jax.random.PRNGKey(0)
    key, xk, pk = jax.random.split(key, 3)

    # Small shapes consistent with the module: ResMLP(input_dim=16, output_dim=8,
    # hidden_dim=64, n_hidden=1).  B=200 exercises a 2-step grid (both v7x TCs)
    # plus the batch-edge padding path.
    B, input_dim, output_dim, hidden_dim, n_hidden = 200, 16, 8, 64, 1

    x = jax.random.normal(xk, (B, input_dim), jnp.float32)
    weights, biases = init_resmlp_params(pk, input_dim, output_dim,
                                         hidden_dim=hidden_dim,
                                         n_hidden=n_hidden)

    out = resmlp_forward(x, weights, biases)
    out = jax.block_until_ready(out)

    ref = resmlp_reference(x, weights, biases)
    assert out.shape == (B, output_dim), out.shape
    max_err = float(jnp.max(jnp.abs(out - ref)))
    assert jnp.allclose(out, ref, atol=1e-3, rtol=1e-3), max_err

    print("KERNEL_OK")
</pallas_src>

<mosaic_0001>
module attributes {stable_mosaic.version = 11 : i64} {
  func.func @_resmlp_kernel(%arg0: i32, %arg1: memref<112x16xf32, #tpu.memory_space<vmem>>, %arg2: memref<16x128xbf16, #tpu.memory_space<vmem>>, %arg3: memref<1x128x128xbf16, #tpu.memory_space<vmem>>, %arg4: memref<128x8xbf16, #tpu.memory_space<vmem>>, %arg5: memref<2x128xf32, #tpu.memory_space<vmem>>, %arg6: memref<1x8xf32, #tpu.memory_space<vmem>>, %arg7: memref<112x8xf32, #tpu.memory_space<vmem>>) attributes {dimension_semantics = [#tpu.dimension_semantics<parallel>], iteration_bounds = array<i64: 2>, scalar_prefetch = 0 : i64, scratch_operands = 0 : i64, tpu.core_type = #tpu.core_type<tc>, window_params = [{transform_indices = @transform_0, window_bounds = array<i64: 112, 16>}, {pipeline_mode = #tpu.pipeline_mode<synchronous>, transform_indices = @transform_1, window_bounds = array<i64: 16, 128>}, {pipeline_mode = #tpu.pipeline_mode<synchronous>, transform_indices = @transform_2, window_bounds = array<i64: 1, 128, 128>}, {pipeline_mode = #tpu.pipeline_mode<synchronous>, transform_indices = @transform_3, window_bounds = array<i64: 128, 8>}, {pipeline_mode = #tpu.pipeline_mode<synchronous>, transform_indices = @transform_4, window_bounds = array<i64: 2, 128>}, {pipeline_mode = #tpu.pipeline_mode<synchronous>, transform_indices = @transform_5, window_bounds = array<i64: 1, 8>}, {transform_indices = @transform_6, window_bounds = array<i64: 112, 8>}]} {
    %c0 = arith.constant 0 : index
    %c0_0 = arith.constant 0 : index
    %0 = vector.load %arg1[%c0, %c0_0] : memref<112x16xf32, #tpu.memory_space<vmem>>, vector<112x16xf32>
    %1 = arith.truncf %0 : vector<112x16xf32> to vector<112x16xbf16>
    %c0_1 = arith.constant 0 : index
    %c0_2 = arith.constant 0 : index
    %2 = vector.load %arg2[%c0_1, %c0_2] : memref<16x128xbf16, #tpu.memory_space<vmem>>, vector<16x128xbf16>
    %cst = arith.constant dense<0.000000e+00> : vector<112x128xf32>
    %3 = tpu.matmul %1, %2, %cst {dimension_numbers = #tpu.dot_dimension_numbers<[1], [0], [0], [1], [0, 0, 1, 1], [], []>} : vector<112x16xbf16>, vector<16x128xbf16>, vector<112x128xf32> -> vector<112x128xf32>
    %c0_3 = arith.constant 0 : index
    %c0_4 = arith.constant 0 : index
    %4 = vector.load %arg5[%c0_3, %c0_4] : memref<2x128xf32, #tpu.memory_space<vmem>>, vector<1x128xf32>
    %5 = vector.broadcast %4 : vector<1x128xf32> to vector<112x128xf32>
    %6 = arith.addf %3, %5 : vector<112x128xf32>
    %cst_5 = arith.constant 0.000000e+00 : f32
    %7 = vector.broadcast %cst_5 : f32 to vector<112x128xf32>
    %8 = arith.maximumf %6, %7 : vector<112x128xf32>
    %9 = arith.addf %6, %8 : vector<112x128xf32>
    %10 = arith.truncf %9 : vector<112x128xf32> to vector<112x128xbf16>
    %c0_6 = arith.constant 0 : index
    %c0_7 = arith.constant 0 : index
    %c0_8 = arith.constant 0 : index
    %11 = vector.load %arg3[%c0_6, %c0_7, %c0_8] : memref<1x128x128xbf16, #tpu.memory_space<vmem>>, vector<1x128x128xbf16>
    %12 = vector.shape_cast %11 : vector<1x128x128xbf16> to vector<128x128xbf16>
    %cst_9 = arith.constant dense<0.000000e+00> : vector<112x128xf32>
    %13 = tpu.matmul %10, %12, %cst_9 {dimension_numbers = #tpu.dot_dimension_numbers<[1], [0], [0], [1], [0, 0, 1, 1], [], []>} : vector<112x128xbf16>, vector<128x128xbf16>, vector<112x128xf32> -> vector<112x128xf32>
    %c1 = arith.constant 1 : index
    %c0_10 = arith.constant 0 : index
    %14 = vector.load %arg5[%c1, %c0_10] : memref<2x128xf32, #tpu.memory_space<vmem>>, vector<1x128xf32>
    %15 = vector.broadcast %14 : vector<1x128xf32> to vector<112x128xf32>
    %16 = arith.addf %13, %15 : vector<112x128xf32>
    %17 = arith.addf %9, %16 : vector<112x128xf32>
    %cst_11 = arith.constant 0.000000e+00 : f32
    %18 = vector.broadcast %cst_11 : f32 to vector<112x128xf32>
    %19 = arith.maximumf %17, %18 : vector<112x128xf32>
    %20 = arith.addf %17, %19 : vector<112x128xf32>
    %21 = arith.truncf %20 : vector<112x128xf32> to vector<112x128xbf16>
    %c0_12 = arith.constant 0 : index
    %c0_13 = arith.constant 0 : index
    %22 = vector.load %arg4[%c0_12, %c0_13] : memref<128x8xbf16, #tpu.memory_space<vmem>>, vector<128x8xbf16>
    %cst_14 = arith.constant dense<0.000000e+00> : vector<112x8xf32>
    %23 = tpu.matmul %21, %22, %cst_14 {dimension_numbers = #tpu.dot_dimension_numbers<[1], [0], [0], [1], [0, 0, 1, 1], [], []>} : vector<112x128xbf16>, vector<128x8xbf16>, vector<112x8xf32> -> vector<112x8xf32>
    %c0_15 = arith.constant 0 : index
    %c0_16 = arith.constant 0 : index
    %24 = vector.load %arg6[%c0_15, %c0_16] : memref<1x8xf32, #tpu.memory_space<vmem>>, vector<1x8xf32>
    %25 = vector.broadcast %24 : vector<1x8xf32> to vector<112x8xf32>
    %26 = arith.addf %23, %25 : vector<112x8xf32>
    %c0_17 = arith.constant 0 : index
    %c0_18 = arith.constant 0 : index
    %27 = vector.load %arg7[%c0_17, %c0_18] : memref<112x8xf32, #tpu.memory_space<vmem>>, vector<112x8xf32>
    tpu.vector_store %arg7[%c0_17, %c0_18], %26 {strides = array<i32>} : memref<112x8xf32, #tpu.memory_space<vmem>>, vector<112x8xf32>,
    return
  }
  func.func @transform_0(%arg0: i32) -> (i32, i32) {
    %c0_i32 = arith.constant 0 : i32
    %c0_i32_0 = arith.constant 0 : i32
    return %arg0, %c0_i32 : i32, i32
  }
  func.func @transform_1(%arg0: i32) -> (i32, i32) {
    %c0_i32 = arith.constant 0 : i32
    %c0_i32_0 = arith.constant 0 : i32
    %c0_i32_1 = arith.constant 0 : i32
    return %c0_i32, %c0_i32_0 : i32, i32
  }
  func.func @transform_2(%arg0: i32) -> (i32, i32, i32) {
    %c0_i32 = arith.constant 0 : i32
    %c0_i32_0 = arith.constant 0 : i32
    %c0_i32_1 = arith.constant 0 : i32
    %c0_i32_2 = arith.constant 0 : i32
    return %c0_i32, %c0_i32_0, %c0_i32_1 : i32, i32, i32
  }
  func.func @transform_3(%arg0: i32) -> (i32, i32) {
    %c0_i32 = arith.constant 0 : i32
    %c0_i32_0 = arith.constant 0 : i32
    %c0_i32_1 = arith.constant 0 : i32
    return %c0_i32, %c0_i32_0 : i32, i32
  }
  func.func @transform_4(%arg0: i32) -> (i32, i32) {
    %c0_i32 = arith.constant 0 : i32
    %c0_i32_0 = arith.constant 0 : i32
    %c0_i32_1 = arith.constant 0 : i32
    return %c0_i32, %c0_i32_0 : i32, i32
  }
  func.func @transform_5(%arg0: i32) -> (i32, i32) {
    %c0_i32 = arith.constant 0 : i32
    %c0_i32_0 = arith.constant 0 : i32
    %c0_i32_1 = arith.constant 0 : i32
    return %c0_i32, %c0_i32_0 : i32, i32
  }
  func.func @transform_6(%arg0: i32) -> (i32, i32) {
    %c0_i32 = arith.constant 0 : i32
    %c0_i32_0 = arith.constant 0 : i32
    return %arg0, %c0_i32 : i32, i32
  }
}

</mosaic_0001>

<llo_original>
// kernel: tpu_custom_call.1
$region0: #{tpu_custom_call.1}
  #allocation0 [shape = 'u32[]', space=smem, size = 0x4, offset = 0x4, fixed_abs, tag = 'smem constant byte address 0x4 - core index']
  #allocation1 [shape = 'u32[144,128]{1,0:T(1,128)}', space=vmem, size = 0x12000, scoped, tag = 'internal scratch']
  %s0 = inlined_call_operand.vmem [shape: f32[224,16], index: 0, kind: input, shape index: {}]
  %s1 = inlined_call_operand.vmem [shape: bf16[16,128], index: 1, kind: input, shape index: {}]
  %s2 = inlined_call_operand.vmem [shape: bf16[1,128,128], index: 2, kind: input, shape index: {}]
  %s3 = inlined_call_operand.vmem [shape: bf16[128,8], index: 3, kind: input, shape index: {}]
  %s4 = inlined_call_operand.vmem [shape: f32[2,128], index: 4, kind: input, shape index: {}]
  %s5 = inlined_call_operand.vmem [shape: f32[1,8], index: 5, kind: input, shape index: {}]
  %s6 = inlined_call_operand.vmem [shape: f32[224,8], index: 6, kind: output, shape index: {}]
  %s7 = sld [smem:[#allocation0]]
  $region57: #{tpu_custom_call.1} parent=0
    _
  %s9 = ssub.s32 1, %s7
  %s10 = scalar_select 0, %s9, %s7
  loop: start=0, step=1, limit=4
  $region2: #{tpu_custom_call.1} parent=0 // loop_pre_header
    _
  $region3: #{tpu_custom_call.1} parent=0 // loop_header
    %s12 = sphi 0, %s16
    %p13 = scmp.ge.s32.totalorder %s12, 4
    %s22 = sphi 0, %s24
    %s25 = sphi 0, %s22
    %s26 = sphi 0, %s25
    %s42 = sphi 0, %s26
    %s46 = sphi 0, %s46
    %s48 = sphi 0, %s46
    %s49 = sphi 0, %s48
    %s63 = sphi 0, %s49
    %s67 = sphi 0, %s67
    %s69 = sphi 0, %s67
    %s70 = sphi 0, %s69
    %s84 = sphi 0, %s70
    %s88 = sphi 0, %s88
    %s90 = sphi 0, %s88
    %s91 = sphi 0, %s90
    %s105 = sphi 0, %s91
    %s109 = sphi 0, %s109
    %s111 = sphi 0, %s109
    %s112 = sphi 0, %s111
    %s126 = sphi 0, %s112
    %s130 = sphi 0, %s130
    %s132 = sphi 0, %s130
    %s133 = sphi 0, %s132
    %s147 = sphi 0, %s133
    %s153 = sphi 0, %s155
    %s156 = sphi 0, %s153
    %s157 = sphi 0, %s156
    %s173 = sphi 0, %s157
  $region4: #{tpu_custom_call.1} parent=0 // loop_header_branch
    %15 = sbr.rel (%p13) target = $region8
  $region5: #{tpu_custom_call.1} parent=0 // loop_body
    %s17 = ssub.s32 %s12, 1
    %s18 = ssub.s32 %s12, 2
    %s19 = sadd.s32 %s12, 1
    %s20 = ssub.s32 %s12, %s19
    %p21 = scmp.eq.s32.totalorder %s20, 0
    %s23 = sadd.s32 %s22, 1
    %s24 = scalar_select %p21, %s22, %s23
    %p27 = pneg %p21
    %p28 = scmp.eq.s32.totalorder %s12, 1
    %p29 = por %p27, %p28
    %p30 = scmp.ne.s32.totalorder %s22, %s25
    %p31 = scmp.eq.s32.totalorder %s12, 0
    %p32 = por %p30, %p31
    %p33 = scmp.ne.s32.totalorder %s22, %s25
    %p34 = scmp.eq.s32.totalorder %s17, 1
    %p35 = por %p33, %p34
    %p36 = scmp.ne.s32.totalorder %s25, %s26
    %p37 = scmp.eq.s32.totalorder %s17, 0
    %p38 = por %p36, %p37
    %p39 = scmp.ne.s32.totalorder %s25, %s26
    %p40 = scmp.eq.s32.totalorder %s18, 1
    %p41 = por %p39, %p40
    %p43 = scmp.ne.s32.totalorder %s26, %s42
    %p44 = scmp.eq.s32.totalorder %s18, 0
    %p45 = por %p43, %p44
    %s47 = sadd.s32 %s46, 1
    %p50 = scmp.eq.s32.totalorder %s12, 1
    %p51 = scmp.ne.s32.totalorder %s46, %s48
    %p52 = scmp.eq.s32.totalorder %s12, 0
    %p53 = por %p51, %p52
    %p54 = scmp.ne.s32.totalorder %s46, %s48
    %p55 = scmp.eq.s32.totalorder %s17, 1
    %p56 = por %p54, %p55
    %p57 = scmp.ne.s32.totalorder %s48, %s49
    %p58 = scmp.eq.s32.totalorder %s17, 0
    %p59 = por %p57, %p58
    %p60 = scmp.ne.s32.totalorder %s48, %s49
    %p61 = scmp.eq.s32.totalorder %s18, 1
    %p62 = por %p60, %p61
    %p64 = scmp.ne.s32.totalorder %s49, %s63
    %p65 = scmp.eq.s32.totalorder %s18, 0
    %p66 = por %p64, %p65
    %s68 = sadd.s32 %s67, 1
    %p71 = scmp.eq.s32.totalorder %s12, 1
    %p72 = scmp.ne.s32.totalorder %s67, %s69
    %p73 = scmp.eq.s32.totalorder %s12, 0
    %p74 = por %p72, %p73
    %p75 = scmp.ne.s32.totalorder %s67, %s69
    %p76 = scmp.eq.s32.totalorder %s17, 1
    %p77 = por %p75, %p76
    %p78 = scmp.ne.s32.totalorder %s69, %s70
    %p79 = scmp.eq.s32.totalorder %s17, 0
    %p80 = por %p78, %p79
    %p81 = scmp.ne.s32.totalorder %s69, %s70
    %p82 = scmp.eq.s32.totalorder %s18, 1
    %p83 = por %p81, %p82
    %p85 = scmp.ne.s32.totalorder %s70, %s84
    %p86 = scmp.eq.s32.totalorder %s18, 0
    %p87 = por %p85, %p86
    %s89 = sadd.s32 %s88, 1
    %p92 = scmp.eq.s32.totalorder %s12, 1
    %p93 = scmp.ne.s32.totalorder %s88, %s90
    %p94 = scmp.eq.s32.totalorder %s12, 0
    %p95 = por %p93, %p94
    %p96 = scmp.ne.s32.totalorder %s88, %s90
    %p97 = scmp.eq.s32.totalorder %s17, 1
    %p98 = por %p96, %p97
    %p99 = scmp.ne.s32.totalorder %s90, %s91
    %p100 = scmp.eq.s32.totalorder %s17, 0
    %p101 = por %p99, %p100
    %p102 = scmp.ne.s32.totalorder %s90, %s91
    %p103 = scmp.eq.s32.totalorder %s18, 1
    %p104 = por %p102, %p103
    %p106 = scmp.ne.s32.totalorder %s91, %s105
    %p107 = scmp.eq.s32.totalorder %s18, 0
    %p108 = por %p106, %p107
    %s110 = sadd.s32 %s109, 1
    %p113 = scmp.eq.s32.totalorder %s12, 1
    %p114 = scmp.ne.s32.totalorder %s109, %s111
    %p115 = scmp.eq.s32.totalorder %s12, 0
    %p116 = por %p114, %p115
    %p117 = scmp.ne.s32.totalorder %s109, %s111
    %p118 = scmp.eq.s32.totalorder %s17, 1
    %p119 = por %p117, %p118
    %p120 = scmp.ne.s32.totalorder %s111, %s112
    %p121 = scmp.eq.s32.totalorder %s17, 0
    %p122 = por %p120, %p121
    %p123 = scmp.ne.s32.totalorder %s111, %s112
    %p124 = scmp.eq.s32.totalorder %s18, 1
    %p125 = por %p123, %p124
    %p127 = scmp.ne.s32.totalorder %s112, %s126
    %p128 = scmp.eq.s32.totalorder %s18, 0
    %p129 = por %p127, %p128
    %s131 = sadd.s32 %s130, 1
    %p134 = scmp.eq.s32.totalorder %s12, 1
    %p135 = scmp.ne.s32.totalorder %s130, %s132
    %p136 = scmp.eq.s32.totalorder %s12, 0
    %p137 = por %p135, %p136
    %p138 = scmp.ne.s32.totalorder %s130, %s132
    %p139 = scmp.eq.s32.totalorder %s17, 1
    %p140 = por %p138, %p139
    %p141 = scmp.ne.s32.totalorder %s132, %s133
    %p142 = scmp.eq.s32.totalorder %s17, 0
    %p143 = por %p141, %p142
    %p144 = scmp.ne.s32.totalorder %s132, %s133
    %p145 = scmp.eq.s32.totalorder %s18, 1
    %p146 = por %p144, %p145
    %p148 = scmp.ne.s32.totalorder %s133, %s147
    %p149 = scmp.eq.s32.totalorder %s18, 0
    %p150 = por %p148, %p149
    %s151 = ssub.s32 %s12, %s19
    %p152 = scmp.eq.s32.totalorder %s151, 0
    %s154 = sadd.s32 %s153, 1
    %s155 = scalar_select %p152, %s153, %s154
    %p158 = pneg %p152
    %p159 = scmp.eq.s32.totalorder %s12, 1
    %p160 = por %p158, %p159
    %p161 = scmp.ne.s32.totalorder %s153, %s156
    %p162 = scmp.eq.s32.totalorder %s12, 0
    %p163 = por %p161, %p162
    %p164 = scmp.ne.s32.totalorder %s153, %s156
    %p165 = scmp.eq.s32.totalorder %s17, 1
    %p166 = por %p164, %p165
    %p167 = scmp.ne.s32.totalorder %s156, %s157
    %p168 = scmp.eq.s32.totalorder %s17, 0
    %p169 = por %p167, %p168
    %p170 = scmp.ne.s32.totalorder %s156, %s157
    %p171 = scmp.eq.s32.totalorder %s18, 1
    %p172 = por %p170, %p171
    %p174 = scmp.ne.s32.totalorder %s157, %s173
    %p175 = scmp.eq.s32.totalorder %s18, 0
    %p176 = por %p174, %p175
    %p177 = scmp.le.s32.totalorder 1, %s12
    %p178 = scmp.lt.s32.totalorder %s12, 3
    %p179 = pnand %p177, %p178
    %p180 = pneg %p179
    // Predicated region
    $region9: #{tpu_custom_call.1} parent=5 // pred_check
      _
    $region10: #{tpu_custom_call.1} parent=5 // pred_check_branch
      %182 = sbr.rel (%p179) target = $region12
    $region11: #{tpu_custom_call.1} parent=5 // pred_region
      %s183 = ssub.s32 %s12, 1
      // Predicated region
      $region13: #{tpu_custom_call.1} parent=11 // pred_check
        %p184 = pneg %p59
      $region14: #{tpu_custom_call.1} parent=11 // pred_check_branch
        %186 = sbr.rel (%p184) target = $region16
      $region15: #{tpu_custom_call.1} parent=11 // pred_region
        _
      $region16: #{tpu_custom_call.1} parent=11 // pred_fallthru
        _
      // Predicated region
      $region17: #{tpu_custom_call.1} parent=11 // pred_check
        %p187 = pneg %p80
      $region18: #{tpu_custom_call.1} parent=11 // pred_check_branch
        %189 = sbr.rel (%p187) target = $region20
      $region19: #{tpu_custom_call.1} parent=11 // pred_region
        _
      $region20: #{tpu_custom_call.1} parent=11 // pred_fallthru
        _
      // Predicated region
      $region21: #{tpu_custom_call.1} parent=11 // pred_check
        %p190 = pneg %p101
      $region22: #{tpu_custom_call.1} parent=11 // pred_check_branch
        %192 = sbr.rel (%p190) target = $region24
      $region23: #{tpu_custom_call.1} parent=11 // pred_region
        _
      $region24: #{tpu_custom_call.1} parent=11 // pred_fallthru
        _
      // Predicated region
      $region25: #{tpu_custom_call.1} parent=11 // pred_check
        %p193 = pneg %p122
      $region26: #{tpu_custom_call.1} parent=11 // pred_check_branch
        %195 = sbr.rel (%p193) target = $region28
      $region27: #{tpu_custom_call.1} parent=11 // pred_region
        _
      $region28: #{tpu_custom_call.1} parent=11 // pred_fallthru
        _
      // Predicated region
      $region29: #{tpu_custom_call.1} parent=11 // pred_check
        %p196 = pneg %p143
      $region30: #{tpu_custom_call.1} parent=11 // pred_check_branch
        %198 = sbr.rel (%p196) target = $region32
      $region31: #{tpu_custom_call.1} parent=11 // pred_region
        _
      $region32: #{tpu_custom_call.1} parent=11 // pred_fallthru
        _
    $region12: #{tpu_custom_call.1} parent=5 // pred_fallthru
      _
    %p199 = scmp.lt.s32.totalorder %s12, 2
    // Predicated region
    $region33: #{tpu_custom_call.1} parent=5 // pred_check
      %p200 = pneg %p199
    $region34: #{tpu_custom_call.1} parent=5 // pred_check_branch
      %202 = sbr.rel (%p200) target = $region36
    $region35: #{tpu_custom_call.1} parent=5 // pred_region
      // Predicated region
      $region37: #{tpu_custom_call.1} parent=35 // pred_check
        %p203 = pneg %p32
      $region38: #{tpu_custom_call.1} parent=35 // pred_check_branch
        %205 = sbr.rel (%p203) target = $region40
      $region39: #{tpu_custom_call.1} parent=35 // pred_region
        %s206 = smul.u32 14, %s12
        %p207 = scmp.lt.s32.totalorder %s206, 27
        %s208 = scalar_select %p207, %s206, 27
        %s209 = smul.addr %s208, 8
        %s210 = scalar_lea.vmem %s0, %s209
        %s211 = smul.u32 14, %s12
      $region40: #{tpu_custom_call.1} parent=35 // pred_fallthru
        _
    $region36: #{tpu_custom_call.1} parent=5 // pred_fallthru
      _
    %p212 = scmp.le.s32.totalorder 1, %s12
    %p213 = scmp.lt.s32.totalorder %s12, 3
    %p214 = pnand %p212, %p213
    %p215 = pneg %p214
    // Predicated region
    $region41: #{tpu_custom_call.1} parent=5 // pred_check
      _
    $region42: #{tpu_custom_call.1} parent=5 // pred_check_branch
      %217 = sbr.rel (%p214) target = $region44
    $region43: #{tpu_custom_call.1} parent=5 // pred_region
      %s218 = ssub.s32 %s12, 1
      %s219 = smul.u32 14, %s17
      %p220 = scmp.lt.s32.totalorder %s219, 27
      %s221 = scalar_select %p220, %s219, 27
      %s222 = smul.addr %s221, 8
      %s223 = scalar_lea.vmem %s0, %s222
      %p224 = pneg %p38
      %p225 = pneg %p35
      %p226 = pneg %p59
      %p227 = pneg %p56
      %p228 = pneg %p80
      %p229 = pneg %p77
      %p230 = pneg %p101
      %p231 = pneg %p98
      %p232 = pneg %p122
      %p233 = pneg %p119
      %p234 = pneg %p143
      %p235 = pneg %p140
      %p236 = pneg %p169
      %p237 = pneg %p166
      %s238 = smul.u32 14, %s17
      %p239 = scmp.lt.s32.totalorder %s238, 27
      %s240 = scalar_select %p239, %s238, 27
      %s241 = smul.addr %s240, 8
      %s242 = scalar_lea.vmem %s6, %s241
      %s243 = smul.u32 14, %s17
      %p244 = scmp.lt.s32.totalorder %s243, 27
      %s245 = scalar_select %p244, %s243, 27
      %s246 = smul.addr %s245, 8
      %s247 = scalar_lea.vmem %s0, %s246
      %s248 = smul.u32 14, %s17
      %s249 = smul.u32 14, %s17
      %p250 = scmp.lt.s32.totalorder %s249, 27
      %s251 = scalar_select %p250, %s249, 27
      %s252 = smul.addr %s251, 8
      %s253 = scalar_lea.vmem %s6, %s252
      %s254 = smul.u32 14, %s17
      %v256 = vld [vmem:[%s247] sm:$0xff]
      %v257 = vld [vmem:[%s247 + $0x8] sm:$0xff]
      %v258 = vld [vmem:[%s247 + $0x10] sm:$0xff]
      %v259 = vld [vmem:[%s247 + $0x18] sm:$0xff]
      %v260 = vld [vmem:[%s247 + $0x20] sm:$0xff]
      %v261 = vld [vmem:[%s247 + $0x28] sm:$0xff]
      %v262 = vld [vmem:[%s247 + $0x30] sm:$0xff]
      %v263 = vld [vmem:[%s247 + $0x38] sm:$0xff]
      %v264 = vld [vmem:[%s247 + $0x40] sm:$0xff]
      %v265 = vld [vmem:[%s247 + $0x48] sm:$0xff]
      %v266 = vld [vmem:[%s247 + $0x50] sm:$0xff]
      %v267 = vld [vmem:[%s247 + $0x58] sm:$0xff]
      %v268 = vld [vmem:[%s247 + $0x60] sm:$0xff]
      %v269 = vld [vmem:[%s247 + $0x68] sm:$0xff]
      %v270 = vpack.c.bf16 %v257, %v256
      %v271 = vpack.c.bf16 %v259, %v258
      %v272 = vpack.c.bf16 %v261, %v260
      %v273 = vpack.c.bf16 %v263, %v262
      %v274 = vpack.c.bf16 %v265, %v264
      %v275 = vpack.c.bf16 %v267, %v266
      %v276 = vpack.c.bf16 %v269, %v268
      %v277 = vld [vmem:[%s1] sm:$0xf]
      %v278 = vld [vmem:[%s1 + $0x4] sm:$0xf]
      %v279 = vld [vmem:[%s4] sm:$0x1]
      %v280 = vlaneseq
      %v281 = vshrl.u32 %v280, 7
      %v282 = vsub.s32 0, %v281
      %v283 = vrot.slane %v279, %v282
      %v286 = vunpack.c.l.b16 %v277
      %v287 = vunpack.c.l.b16 %v278
      %v288 = vpack.c.b16 %v287, %v286
      %vm290 = vcmask 130048
      %v292 = vsel %vm290, %v270, 0
      %v295 = vsel %vm290, %v271, 0
      %v298 = vsel %vm290, %v272, 0
      %v301 = vsel %vm290, %v273, 0
      %v304 = vsel %vm290, %v274, 0
      %v307 = vsel %vm290, %v275, 0
      %v310 = vsel %vm290, %v276, 0
      %312 = vmatprep.subr.bf16.mxu0 0
      %313 = vmatpush1.bf16.msra.mxu0 %v288
      %314 = vmatprep.subr.bf16.mxu0 0
      %315 = vmatpush1.bf16.msra.mxu0 0
      %316 = vmatprep.subr.bf16.mxu0 0
      %317 = vmatpush1.bf16.msra.mxu0 0
      %318 = vmatprep.subr.bf16.mxu0 0
      %319 = vmatpush1.bf16.msra.mxu0 0
      %320 = vmatprep.subr.bf16.mxu0 0
      %321 = vmatpush1.bf16.msra.mxu0 0
      %322 = vmatprep.subr.bf16.mxu0 0
      %323 = vmatpush1.bf16.msra.mxu0 0
      %324 = vmatprep.subr.bf16.mxu0 0
      %325 = vmatpush1.bf16.msra.mxu0 0
      %326 = vmatprep.subr.bf16.mxu0 0
      %327 = vmatpush1.bf16.msra.mxu0 0
      %328 = vmatprep.subr.bf16.mxu0 0
      %329 = vmatpush1.bf16.msra.mxu0 0
      %330 = vmatprep.subr.bf16.mxu0 0
      %331 = vmatpush1.bf16.msra.mxu0 0
      %332 = vmatprep.subr.bf16.mxu0 0
      %333 = vmatpush1.bf16.msra.mxu0 0
      %334 = vmatprep.subr.bf16.mxu0 0
      %335 = vmatpush1.bf16.msra.mxu0 0
      %336 = vmatprep.subr.bf16.mxu0 0
      %337 = vmatpush1.bf16.msra.mxu0 0
      %338 = vmatprep.subr.bf16.mxu0 0
      %339 = vmatpush1.bf16.msra.mxu0 0
      %340 = vmatprep.subr.bf16.mxu0 0
      %341 = vmatpush1.bf16.msra.mxu0 0
      %342 = vmatprep.subr.bf16.mxu0 0
      %343 = vmatpush1.bf16.msra.mxu0 0
      %344 = vmatprep.mubr.bf16.mxu0 0
      %345 = vmatmul.mubr.bf16.gmra.mrb[0].mxu0 %v292
      %v346 = vpop.f32.mrb[0].mxu0
      %v347 = vadd.f32 %v283, %v346
      %v348 = vpop.f32.mrb[0].mxu0
      %v349 = vpop.f32.mrb[0].mxu0
      %v350 = vadd.f32 %v283, %v349
      %v351 = vpop.f32.mrb[0].mxu0
      %352 = vmatprep.mubr.bf16.mxu0 0
      %353 = vmatmul.mubr.bf16.gmra.mrb[0].mxu0 %v295
      %v354 = vpop.f32.mrb[0].mxu0
      %v355 = vadd.f32 %v283, %v354
      %v356 = vpop.f32.mrb[0].mxu0
      %v357 = vpop.f32.mrb[0].mxu0
      %v358 = vadd.f32 %v283, %v357
      %v359 = vpop.f32.mrb[0].mxu0
      %360 = vmatprep.mubr.bf16.mxu0 0
      %361 = vmatmul.mubr.bf16.gmra.mrb[0].mxu0 %v298
      %v362 = vpop.f32.mrb[0].mxu0
      %v363 = vadd.f32 %v283, %v362
      %v364 = vpop.f32.mrb[0].mxu0
      %v365 = vpop.f32.mrb[0].mxu0
      %v366 = vadd.f32 %v283, %v365
      %v367 = vpop.f32.mrb[0].mxu0
      %368 = vmatprep.mubr.bf16.mxu0 0
      %369 = vmatmul.mubr.bf16.gmra.mrb[0].mxu0 %v301
      %v370 = vpop.f32.mrb[0].mxu0
      %v371 = vadd.f32 %v283, %v370
      %v372 = vpop.f32.mrb[0].mxu0
      %v373 = vpop.f32.mrb[0].mxu0
      %v374 = vadd.f32 %v283, %v373
      %v375 = vpop.f32.mrb[0].mxu0
      %376 = vmatprep.mubr.bf16.mxu0 0
      %377 = vmatmul.mubr.bf16.gmra.mrb[0].mxu0 %v304
      %v378 = vpop.f32.mrb[0].mxu0
      %v379 = vadd.f32 %v283, %v378
      %v380 = vpop.f32.mrb[0].mxu0
      %v381 = vpop.f32.mrb[0].mxu0
      %v382 = vadd.f32 %v283, %v381
      %v383 = vpop.f32.mrb[0].mxu0
      %384 = vmatprep.mubr.bf16.mxu0 0
      %385 = vmatmul.mubr.bf16.gmra.mrb[0].mxu0 %v307
      %v386 = vpop.f32.mrb[0].mxu0
      %v387 = vadd.f32 %v283, %v386
      %v388 = vpop.f32.mrb[0].mxu0
      %v389 = vpop.f32.mrb[0].mxu0
      %v390 = vadd.f32 %v283, %v389
      %v391 = vpop.f32.mrb[0].mxu0
      %392 = vmatprep.mubr.bf16.mxu0 0
      %393 = vmatmul.mubr.bf16.gmra.mrb[0].mxu0 %v310
      %v394 = vpop.f32.mrb[0].mxu0
      %v395 = vadd.f32 %v283, %v394
      %v396 = vpop.f32.mrb[0].mxu0
      %v397 = vpop.f32.mrb[0].mxu0
      %v398 = vadd.f32 %v283, %v397
      %v399 = vpop.f32.mrb[0].mxu0
      %400 = vdwg.mxu0
      %v401 = vmax.f32 %v347, 0.0
      %v402 = vmax.f32 %v350, 0.0
      %v403 = vmax.f32 %v355, 0.0
      %v404 = vmax.f32 %v358, 0.0
      %v405 = vmax.f32 %v363, 0.0
      %v406 = vmax.f32 %v366, 0.0
      %v407 = vmax.f32 %v371, 0.0
      %v408 = vmax.f32 %v374, 0.0
      %v409 = vmax.f32 %v379, 0.0
      %v410 = vmax.f32 %v382, 0.0
      %v411 = vmax.f32 %v387, 0.0
      %v412 = vmax.f32 %v390, 0.0
      %v413 = vmax.f32 %v395, 0.0
      %v414 = vmax.f32 %v398, 0.0
      %v415 = vadd.f32 %v347, %v401
      %v416 = vadd.f32 %v350, %v402
      %v417 = vadd.f32 %v355, %v403
      %v418 = vadd.f32 %v358, %v404
      %v419 = vadd.f32 %v363, %v405
      %v420 = vadd.f32 %v366, %v406
      %v421 = vadd.f32 %v371, %v407
      %v422 = vadd.f32 %v374, %v408
      %v423 = vadd.f32 %v379, %v409
      %v424 = vadd.f32 %v382, %v410
      %v425 = vadd.f32 %v387, %v411
      %v426 = vadd.f32 %v390, %v412
      %v427 = vadd.f32 %v395, %v413
      %v428 = vadd.f32 %v398, %v414
      %v429 = vpack.c.bf16 %v416, %v415
      %v430 = vpack.c.bf16 %v418, %v417
      %v431 = vpack.c.bf16 %v420, %v419
      %v432 = vpack.c.bf16 %v422, %v421
      %v433 = vpack.c.bf16 %v424, %v423
      %v434 = vpack.c.bf16 %v426, %v425
      %v435 = vpack.c.bf16 %v428, %v427
      %v436 = vld [vmem:[%s2] sm:$0xf]
      %v437 = vld [vmem:[%s2 + $0x4] sm:$0xf]
      %v438 = vld [vmem:[%s2 + $0x8] sm:$0xf]
      %v439 = vld [vmem:[%s2 + $0xc] sm:$0xf]
      %v440 = vld [vmem:[%s2 + $0x10] sm:$0xf]
      %v441 = vld [vmem:[%s2 + $0x14] sm:$0xf]
      %v442 = vld [vmem:[%s2 + $0x18] sm:$0xf]
      %v443 = vld [vmem:[%s2 + $0x1c] sm:$0xf]
      %v444 = vld [vmem:[%s2 + $0x20] sm:$0xf]
      %v445 = vld [vmem:[%s2 + $0x24] sm:$0xf]
      %v446 = vld [vmem:[%s2 + $0x28] sm:$0xf]
      %v447 = vld [vmem:[%s2 + $0x2c] sm:$0xf]
      %v448 = vld [vmem:[%s2 + $0x30] sm:$0xf]
      %v449 = vld [vmem:[%s2 + $0x34] sm:$0xf]
      %v450 = vld [vmem:[%s2 + $0x38] sm:$0xf]
      %v451 = vld [vmem:[%s2 + $0x3c] sm:$0xf]
      %v452 = vld [vmem:[%s4 + $0x1] sm:$0x1]
      %v453 = vlaneseq
      %v454 = vshrl.u32 %v453, 7
      %v455 = vsub.s32 0, %v454
      %v456 = vrot.slane %v452, %v455
      %v473 = vunpack.c.l.b16 %v436
      %v474 = vunpack.c.l.b16 %v437
      %v475 = vunpack.c.l.b16 %v438
      %v476 = vunpack.c.l.b16 %v439
      %v477 = vunpack.c.l.b16 %v440
      %v478 = vunpack.c.l.b16 %v441
      %v479 = vunpack.c.l.b16 %v442
      %v480 = vunpack.c.l.b16 %v443
      %v481 = vunpack.c.l.b16 %v444
      %v482 = vunpack.c.l.b16 %v445
      %v483 = vunpack.c.l.b16 %v446
      %v484 = vunpack.c.l.b16 %v447
      %v485 = vunpack.c.l.b16 %v448
      %v486 = vunpack.c.l.b16 %v449
      %v487 = vunpack.c.l.b16 %v450
      %v488 = vunpack.c.l.b16 %v451
      %v489 = vpack.c.b16 %v474, %v473
      %v490 = vpack.c.b16 %v476, %v475
      %v491 = vpack.c.b16 %v478, %v477
      %v492 = vpack.c.b16 %v480, %v479
      %v493 = vpack.c.b16 %v482, %v481
      %v494 = vpack.c.b16 %v484, %v483
      %v495 = vpack.c.b16 %v486, %v485
      %v496 = vpack.c.b16 %v488, %v487
      %505 = vmatprep.subr.bf16.mxu0 0
      %506 = vmatpush1.bf16.msra.mxu0 %v489
      %507 = vmatprep.subr.bf16.mxu0 0
      %508 = vmatpush1.bf16.msra.mxu0 %v490
      %509 = vmatprep.subr.bf16.mxu0 0
      %510 = vmatpush1.bf16.msra.mxu0 %v491
      %511 = vmatprep.subr.bf16.mxu0 0
      %512 = vmatpush1.bf16.msra.mxu0 %v492
      %513 = vmatprep.subr.bf16.mxu0 0
      %514 = vmatpush1.bf16.msra.mxu0 %v493
      %515 = vmatprep.subr.bf16.mxu0 0
      %516 = vmatpush1.bf16.msra.mxu0 %v494
      %517 = vmatprep.subr.bf16.mxu0 0
      %518 = vmatpush1.bf16.msra.mxu0 %v495
      %519 = vmatprep.subr.bf16.mxu0 0
      %520 = vmatpush1.bf16.msra.mxu0 %v496
      %521 = vmatprep.subr.bf16.mxu0 0
      %522 = vmatpush1.bf16.msra.mxu0 0
      %523 = vmatprep.subr.bf16.mxu0 0
      %524 = vmatpush1.bf16.msra.mxu0 0
      %525 = vmatprep.subr.bf16.mxu0 0
      %526 = vmatpush1.bf16.msra.mxu0 0
      %527 = vmatprep.subr.bf16.mxu0 0
      %528 = vmatpush1.bf16.msra.mxu0 0
      %529 = vmatprep.subr.bf16.mxu0 0
      %530 = vmatpush1.bf16.msra.mxu0 0
      %531 = vmatprep.subr.bf16.mxu0 0
      %532 = vmatpush1.bf16.msra.mxu0 0
      %533 = vmatprep.subr.bf16.mxu0 0
      %534 = vmatpush1.bf16.msra.mxu0 0
      %535 = vmatprep.subr.bf16.mxu0 0
      %536 = vmatpush1.bf16.msra.mxu0 0
      %537 = vmatprep.mubr.bf16.mxu0 0
      %538 = vmatmul.mubr.bf16.gmra.mrb[0].mxu0 %v429
      %v539 = vpop.f32.mrb[0].mxu0
      %v540 = vadd.f32 %v456, %v539
      %v541 = vpop.f32.mrb[0].mxu0
      %v542 = vpop.f32.mrb[0].mxu0
      %v543 = vadd.f32 %v456, %v542
      %v544 = vpop.f32.mrb[0].mxu0
      %545 = vmatprep.mubr.bf16.mxu0 0
      %546 = vmatmul.mubr.bf16.gmra.mrb[0].mxu0 %v430
      %v547 = vpop.f32.mrb[0].mxu0
      %v548 = vadd.f32 %v456, %v547
      %v549 = vpop.f32.mrb[0].mxu0
      %v550 = vpop.f32.mrb[0].mxu0
      %v551 = vadd.f32 %v456, %v550
      %v552 = vpop.f32.mrb[0].mxu0
      %553 = vmatprep.mubr.bf16.mxu0 0
      %554 = vmatmul.mubr.bf16.gmra.mrb[0].mxu0 %v431
      %v555 = vpop.f32.mrb[0].mxu0
      %v556 = vadd.f32 %v456, %v555
      %v557 = vpop.f32.mrb[0].mxu0
      %v558 = vpop.f32.mrb[0].mxu0
      %v559 = vadd.f32 %v456, %v558
      %v560 = vpop.f32.mrb[0].mxu0
      %561 = vmatprep.mubr.bf16.mxu0 0
      %562 = vmatmul.mubr.bf16.gmra.mrb[0].mxu0 %v432
      %v563 = vpop.f32.mrb[0].mxu0
      %v564 = vadd.f32 %v456, %v563
      %v565 = vpop.f32.mrb[0].mxu0
      %v566 = vpop.f32.mrb[0].mxu0
      %v567 = vadd.f32 %v456, %v566
      %v568 = vpop.f32.mrb[0].mxu0
      %569 = vmatprep.mubr.bf16.mxu0 0
      %570 = vmatmul.mubr.bf16.gmra.mrb[0].mxu0 %v433
      %v571 = vpop.f32.mrb[0].mxu0
      %v572 = vadd.f32 %v456, %v571
      %v573 = vpop.f32.mrb[0].mxu0
      %v574 = vpop.f32.mrb[0].mxu0
      %v575 = vadd.f32 %v456, %v574
      %v576 = vpop.f32.mrb[0].mxu0
      %577 = vmatprep.mubr.bf16.mxu0 0
      %578 = vmatmul.mubr.bf16.gmra.mrb[0].mxu0 %v434
      %v579 = vpop.f32.mrb[0].mxu0
      %v580 = vadd.f32 %v456, %v579
      %v581 = vpop.f32.mrb[0].mxu0
      %v582 = vpop.f32.mrb[0].mxu0
      %v583 = vadd.f32 %v456, %v582
      %v584 = vpop.f32.mrb[0].mxu0
      %585 = vmatprep.mubr.bf16.mxu0 0
      %586 = vmatmul.mubr.bf16.gmra.mrb[0].mxu0 %v435
      %v587 = vpop.f32.mrb[0].mxu0
      %v588 = vadd.f32 %v456, %v587
      %v589 = vpop.f32.mrb[0].mxu0
      %v590 = vpop.f32.mrb[0].mxu0
      %v591 = vadd.f32 %v456, %v590
      %v592 = vpop.f32.mrb[0].mxu0
      %593 = vdwg.mxu0
      %v594 = vadd.f32 %v415, %v540
      %v595 = vadd.f32 %v416, %v543
      %v596 = vadd.f32 %v417, %v548
      %v597 = vadd.f32 %v418, %v551
      %v598 = vadd.f32 %v419, %v556
      %v599 = vadd.f32 %v420, %v559
      %v600 = vadd.f32 %v421, %v564
      %v601 = vadd.f32 %v422, %v567
      %v602 = vadd.f32 %v423, %v572
      %v603 = vadd.f32 %v424, %v575
      %v604 = vadd.f32 %v425, %v580
      %v605 = vadd.f32 %v426, %v583
      %v606 = vadd.f32 %v427, %v588
      %v607 = vadd.f32 %v428, %v591
      %v608 = vmax.f32 %v594, 0.0
      %v609 = vmax.f32 %v595, 0.0
      %v610 = vmax.f32 %v596, 0.0
      %v611 = vmax.f32 %v597, 0.0
      %v612 = vmax.f32 %v598, 0.0
      %v613 = vmax.f32 %v599, 0.0
      %v614 = vmax.f32 %v600, 0.0
      %v615 = vmax.f32 %v601, 0.0
      %v616 = vmax.f32 %v602, 0.0
      %v617 = vmax.f32 %v603, 0.0
      %v618 = vmax.f32 %v604, 0.0
      %v619 = vmax.f32 %v605, 0.0
      %v620 = vmax.f32 %v606, 0.0
      %v621 = vmax.f32 %v607, 0.0
      %v622 = vadd.f32 %v594, %v608
      %v623 = vadd.f32 %v595, %v609
      %v624 = vadd.f32 %v596, %v610
      %v625 = vadd.f32 %v597, %v611
      %v626 = vadd.f32 %v598, %v612
      %v627 = vadd.f32 %v599, %v613
      %v628 = vadd.f32 %v600, %v614
      %v629 = vadd.f32 %v601, %v615
      %v630 = vadd.f32 %v602, %v616
      %v631 = vadd.f32 %v603, %v617
      %v632 = vadd.f32 %v604, %v618
      %v633 = vadd.f32 %v605, %v619
      %v634 = vadd.f32 %v606, %v620
      %v635 = vadd.f32 %v607, %v621
      %v636 = vpack.c.bf16 %v623, %v622
      %v637 = vpack.c.bf16 %v625, %v624
      %v638 = vpack.c.bf16 %v627, %v626
      %v639 = vpack.c.bf16 %v629, %v628
      %v640 = vpack.c.bf16 %v631, %v630
      %v641 = vpack.c.bf16 %v633, %v632
      %v642 = vpack.c.bf16 %v635, %v634
      %v643 = vld [vmem:[%s3] sm:$0xf]
      %v644 = vld [vmem:[%s3 + $0x4] sm:$0xf]
      %v645 = vld [vmem:[%s3 + $0x8] sm:$0xf]
      %v646 = vld [vmem:[%s3 + $0xc] sm:$0xf]
      %v647 = vld [vmem:[%s3 + $0x10] sm:$0xf]
      %v648 = vld [vmem:[%s3 + $0x14] sm:$0xf]
      %v649 = vld [vmem:[%s3 + $0x18] sm:$0xf]
      %v650 = vld [vmem:[%s3 + $0x1c] sm:$0xf]
      %v651 = vld [vmem:[%s3 + $0x20] sm:$0xf]
      %v652 = vld [vmem:[%s3 + $0x24] sm:$0xf]
      %v653 = vld [vmem:[%s3 + $0x28] sm:$0xf]
      %v654 = vld [vmem:[%s3 + $0x2c] sm:$0xf]
      %v655 = vld [vmem:[%s3 + $0x30] sm:$0xf]
      %v656 = vld [vmem:[%s3 + $0x34] sm:$0xf]
      %v657 = vld [vmem:[%s3 + $0x38] sm:$0xf]
      %v658 = vld [vmem:[%s3 + $0x3c] sm:$0xf]
      %v659 = vld [vmem:[%s5] sm:$0x1]
      %v661 = vlaneseq
      %v662 = vshrl.u32 %v661, 7
      %v663 = vsub.s32 0, %v662
      %v664 = vrot.slane %v659, %v663
      %v682 = vunpack.c.l.b16 %v643
      %v683 = vunpack.c.l.b16 %v644
      %v684 = vunpack.c.l.b16 %v645
      %v685 = vunpack.c.l.b16 %v646
      %v686 = vunpack.c.l.b16 %v647
      %v687 = vunpack.c.l.b16 %v648
      %v688 = vunpack.c.l.b16 %v649
      %v689 = vunpack.c.l.b16 %v650
      %v690 = vunpack.c.l.b16 %v651
      %v691 = vunpack.c.l.b16 %v652
      %v692 = vunpack.c.l.b16 %v653
      %v693 = vunpack.c.l.b16 %v654
      %v694 = vunpack.c.l.b16 %v655
      %v695 = vunpack.c.l.b16 %v656
      %v696 = vunpack.c.l.b16 %v657
      %v697 = vunpack.c.l.b16 %v658
      %v698 = vpack.c.b16 %v683, %v682
      %v699 = vpack.c.b16 %v685, %v684
      %v700 = vpack.c.b16 %v687, %v686
      %v701 = vpack.c.b16 %v689, %v688
      %v702 = vpack.c.b16 %v691, %v690
      %v703 = vpack.c.b16 %v693, %v692
      %v704 = vpack.c.b16 %v695, %v694
      %v705 = vpack.c.b16 %v697, %v696
      %714 = vmatprep.subr.bf16.mxu0 0
      %715 = vmatpush1.bf16.msra.mxu0 %v698
      %716 = vmatprep.subr.bf16.mxu0 0
      %717 = vmatpush1.bf16.msra.mxu0 %v699
      %718 = vmatprep.subr.bf16.mxu0 0
      %719 = vmatpush1.bf16.msra.mxu0 %v700
      %720 = vmatprep.subr.bf16.mxu0 0
      %721 = vmatpush1.bf16.msra.mxu0 %v701
      %722 = vmatprep.subr.bf16.mxu0 0
      %723 = vmatpush1.bf16.msra.mxu0 %v702
      %724 = vmatprep.subr.bf16.mxu0 0
      %725 = vmatpush1.bf16.msra.mxu0 %v703
      %726 = vmatprep.subr.bf16.mxu0 0
      %727 = vmatpush1.bf16.msra.mxu0 %v704
      %728 = vmatprep.subr.bf16.mxu0 0
      %729 = vmatpush1.bf16.msra.mxu0 %v705
      %730 = vmatprep.subr.bf16.mxu0 0
      %731 = vmatpush1.bf16.msra.mxu0 0
      %732 = vmatprep.subr.bf16.mxu0 0
      %733 = vmatpush1.bf16.msra.mxu0 0
      %734 = vmatprep.subr.bf16.mxu0 0
      %735 = vmatpush1.bf16.msra.mxu0 0
      %736 = vmatprep.subr.bf16.mxu0 0
      %737 = vmatpush1.bf16.msra.mxu0 0
      %738 = vmatprep.subr.bf16.mxu0 0
      %739 = vmatpush1.bf16.msra.mxu0 0
      %740 = vmatprep.subr.bf16.mxu0 0
      %741 = vmatpush1.bf16.msra.mxu0 0
      %742 = vmatprep.subr.bf16.mxu0 0
      %743 = vmatpush1.bf16.msra.mxu0 0
      %744 = vmatprep.subr.bf16.mxu0 0
      %745 = vmatpush1.bf16.msra.mxu0 0
      %746 = vmatprep.mubr.bf16.mxu0 0
      %747 = vmatmul.mubr.bf16.gmra.mrb[0].mxu0 %v636
      %v748 = vpop.f32.mrb[0].mxu0
      %v749 = vadd.f32 %v664, %v748
      %v750 = vpop.f32.mrb[0].mxu0
      %v751 = vpop.f32.mrb[0].mxu0
      %v752 = vadd.f32 %v664, %v751
      %v753 = vpop.f32.mrb[0].mxu0
      %754 = vmatprep.mubr.bf16.mxu0 0
      %755 = vmatmul.mubr.bf16.gmra.mrb[0].mxu0 %v637
      %v756 = vpop.f32.mrb[0].mxu0
      %v757 = vadd.f32 %v664, %v756
      %v758 = vpop.f32.mrb[0].mxu0
      %v759 = vpop.f32.mrb[0].mxu0
      %v760 = vadd.f32 %v664, %v759
      %v761 = vpop.f32.mrb[0].mxu0
      %762 = vmatprep.mubr.bf16.mxu0 0
      %763 = vmatmul.mubr.bf16.gmra.mrb[0].mxu0 %v638
      %v764 = vpop.f32.mrb[0].mxu0
      %v765 = vadd.f32 %v664, %v764
      %v766 = vpop.f32.mrb[0].mxu0
      %v767 = vpop.f32.mrb[0].mxu0
      %v768 = vadd.f32 %v664, %v767
      %v769 = vpop.f32.mrb[0].mxu0
      %770 = vmatprep.mubr.bf16.mxu0 0
      %771 = vmatmul.mubr.bf16.gmra.mrb[0].mxu0 %v639
      %v772 = vpop.f32.mrb[0].mxu0
      %v773 = vadd.f32 %v664, %v772
      %v774 = vpop.f32.mrb[0].mxu0
      %v775 = vpop.f32.mrb[0].mxu0
      %v776 = vadd.f32 %v664, %v775
      %v777 = vpop.f32.mrb[0].mxu0
      %778 = vmatprep.mubr.bf16.mxu0 0
      %779 = vmatmul.mubr.bf16.gmra.mrb[0].mxu0 %v640
      %v780 = vpop.f32.mrb[0].mxu0
      %v781 = vadd.f32 %v664, %v780
      %v782 = vpop.f32.mrb[0].mxu0
      %v783 = vpop.f32.mrb[0].mxu0
      %v784 = vadd.f32 %v664, %v783
      %v785 = vpop.f32.mrb[0].mxu0
      %786 = vmatprep.mubr.bf16.mxu0 0
      %787 = vmatmul.mubr.bf16.gmra.mrb[0].mxu0 %v641
      %v788 = vpop.f32.mrb[0].mxu0
      %v789 = vadd.f32 %v664, %v788
      %v790 = vpop.f32.mrb[0].mxu0
      %v791 = vpop.f32.mrb[0].mxu0
      %v792 = vadd.f32 %v664, %v791
      %v793 = vpop.f32.mrb[0].mxu0
      %794 = vmatprep.mubr.bf16.mxu0 0
      %795 = vmatmul.mubr.bf16.gmra.mrb[0].mxu0 %v642
      %v796 = vpop.f32.mrb[0].mxu0
      %v797 = vadd.f32 %v664, %v796
      %v798 = vpop.f32.mrb[0].mxu0
      %v799 = vpop.f32.mrb[0].mxu0
      %v800 = vadd.f32 %v664, %v799
      %v801 = vpop.f32.mrb[0].mxu0
      %802 = vdwg.mxu0
      %vm803 = vcmask 64512
      %804 = vst.msk [vmem:[%s253] sm:$0xff] %vm803, %v749
      %805 = vst.msk [vmem:[%s253 + $0x8] sm:$0xff] %vm803, %v752
      %806 = vst.msk [vmem:[%s253 + $0x10] sm:$0xff] %vm803, %v757
      %807 = vst.msk [vmem:[%s253 + $0x18] sm:$0xff] %vm803, %v760
      %808 = vst.msk [vmem:[%s253 + $0x20] sm:$0xff] %vm803, %v765
      %809 = vst.msk [vmem:[%s253 + $0x28] sm:$0xff] %vm803, %v768
      %810 = vst.msk [vmem:[%s253 + $0x30] sm:$0xff] %vm803, %v773
      %811 = vst.msk [vmem:[%s253 + $0x38] sm:$0xff] %vm803, %v776
      %812 = vst.msk [vmem:[%s253 + $0x40] sm:$0xff] %vm803, %v781
      %813 = vst.msk [vmem:[%s253 + $0x48] sm:$0xff] %vm803, %v784
      %814 = vst.msk [vmem:[%s253 + $0x50] sm:$0xff] %vm803, %v789
      %815 = vst.msk [vmem:[%s253 + $0x58] sm:$0xff] %vm803, %v792
      %816 = vst.msk [vmem:[%s253 + $0x60] sm:$0xff] %vm803, %v797
      %817 = vst.msk [vmem:[%s253 + $0x68] sm:$0xff] %vm803, %v800
      %s818 = smul.u32 14, %s17
      %p819 = scmp.lt.s32.totalorder %s818, 27
      %s820 = scalar_select %p819, %s818, 27
      %s821 = smul.addr %s820, 8
      %s822 = scalar_lea.vmem %s6, %s821
      // Predicated region
      $region45: #{tpu_custom_call.1} parent=43 // pred_check
        %p823 = pneg %p166
      $region46: #{tpu_custom_call.1} parent=43 // pred_check_branch
        %825 = sbr.rel (%p823) target = $region48
      $region47: #{tpu_custom_call.1} parent=43 // pred_region
        %s826 = smul.u32 14, %s17
      $region48: #{tpu_custom_call.1} parent=43 // pred_fallthru
        _
    $region44: #{tpu_custom_call.1} parent=5 // pred_fallthru
      _
    %p827 = scmp.le.s32.totalorder 2, %s12
    // Predicated region
    $region49: #{tpu_custom_call.1} parent=5 // pred_check
      %p828 = pneg %p827
    $region50: #{tpu_custom_call.1} parent=5 // pred_check_branch
      %830 = sbr.rel (%p828) target = $region52
    $region51: #{tpu_custom_call.1} parent=5 // pred_region
      %s831 = ssub.s32 %s12, 2
      // Predicated region
      $region53: #{tpu_custom_call.1} parent=51 // pred_check
        %p832 = pneg %p172
      $region54: #{tpu_custom_call.1} parent=51 // pred_check_branch
        %834 = sbr.rel (%p832) target = $region56
      $region55: #{tpu_custom_call.1} parent=51 // pred_region
        %s835 = smul.u32 14, %s18
        %p836 = scmp.lt.s32.totalorder %s835, 27
        %s837 = scalar_select %p836, %s835, 27
        %s838 = smul.addr %s837, 8
        %s839 = scalar_lea.vmem %s6, %s838
      $region56: #{tpu_custom_call.1} parent=51 // pred_fallthru
        _
    $region52: #{tpu_custom_call.1} parent=5 // pred_fallthru
      _
  $region6: #{tpu_custom_call.1} parent=0 // loop_footer
    %s16 = sadd.s32 1, %s12
  $region7: #{tpu_custom_call.1} parent=0 // loop_footer_branch
    %11 = sbr.rel target = $region3
  $region8: #{tpu_custom_call.1} parent=0 // loop_exit
    _

</llo_original>
